<compile_context>
chip_gen: v7x
topology: tpu7x:2x2x1
jax: 0.10.0
libtpu: 0.0.40
codegen_flags: <defaults>
</compile_context>

<pallas_src>
import functools
import math

import jax
import jax.numpy as jnp
from jax.experimental import pallas as pl
from jax.experimental.pallas import tpu as pltpu

# ----------------------------- model config ---------------------------------
HIDDEN = 768
NUM_HEADS = 12
HEAD_DIM = HIDDEN // NUM_HEADS          # 64
INTERMEDIATE = 3072
NUM_LAYERS = 2                          # bert-base has 12; reduced for the demo
VOCAB = 128                             # real vocab is 21128; small for the demo
MAX_POS = 64
TYPE_VOCAB = 2
NUM_CLASSES = 2
LN_EPS = 1e-12


# ------------------------------ helpers --------------------------------------
def _gelu(x):
    # tanh approximation of GELU (f32 math)
    return 0.5 * x * (1.0 + jnp.tanh(0.7978845608028654 * (x + 0.044715 * x * x * x)))


def _layernorm_f32(y, gamma, beta):
    mean = jnp.mean(y, axis=-1, keepdims=True)
    var = jnp.mean((y - mean) * (y - mean), axis=-1, keepdims=True)
    return (y - mean) * jax.lax.rsqrt(var + LN_EPS) * gamma + beta


def _pick_tile_m(M):
    # Cap at 256 rows: fills the 256-wide MXU on v6e/v7x and keeps >=2
    # "parallel" grid steps (v7x megacore) once M >= 512.
    for c in (256, 128, 64, 32, 16, 8):
        if M % c == 0:
            return c
    return M


def _to_bf16(x):
    return x if x.dtype == jnp.bfloat16 else x.astype(jnp.bfloat16)


def _batch_per_block(B, S):
    # Group batch elements so each attention block has a row count that is a
    # multiple of 16 (full bf16 sublane packing); fall back to the whole batch.
    for bb in range(1, B + 1):
        if B % bb == 0 and (bb * S) % 16 == 0:
            return bb
    return B


def build_attn_bias(attention_mask, batch_per_block):
    """(G, R, R) additive bias: key-padding mask plus -1e9 on cross-batch
    (query, key) pairs, so one attention block may hold several batch elems."""
    B, S = attention_mask.shape
    bb = batch_per_block
    G = B // bb
    key_bias = (1.0 - attention_mask.astype(jnp.float32)) * -1e9          # (B, S)
    key_bias = key_bias.reshape(G, bb, S)
    cross = (1.0 - jnp.eye(bb, dtype=jnp.float32)) * -1e9                 # (bb, bb)
    bias = (cross[None, :, None, :, None]                                 # (1,bb,1,bb,1)
            + key_bias[:, None, None, :, :])                              # (G,1,1,bb,S)
    bias = jnp.broadcast_to(bias, (G, bb, S, bb, S))
    return bias.reshape(G, bb * S, bb * S)


# ------------------------------ Pallas kernels ------------------------------
def matmul_bias_kernel(x_ref, w_ref, b_ref, o_ref, *, activation):
    x = _to_bf16(x_ref[...])                                   # bf16 into the MXU
    acc = jnp.dot(x, w_ref[...], preferred_element_type=jnp.float32)
    acc = acc + b_ref[...]                                      # f32 epilogue
    if activation == "gelu":
        acc = _gelu(acc)
    o_ref[...] = acc.astype(o_ref.dtype)


def matmul_bias(x, w, b, activation=None, out_dtype=jnp.bfloat16):
    """x:(M,K) @ w:(K,N) + b:(N,).  1-D grid over M; the (K,N) weight block has
    a constant index_map so it is streamed from HBM once (not per M-tile)."""
    M, K = x.shape
    K2, N = w.shape
    assert K == K2
    tm = _pick_tile_m(M)
    kern = functools.partial(matmul_bias_kernel, activation=activation)
    return pl.pallas_call(
        kern,
        out_shape=jax.ShapeDtypeStruct((M, N), out_dtype),
        grid=(M // tm,),
        in_specs=[
            pl.BlockSpec((tm, K), lambda i: (i, 0)),
            pl.BlockSpec((K, N), lambda i: (0, 0)),
            pl.BlockSpec((1, N), lambda i: (0, 0)),
        ],
        out_specs=pl.BlockSpec((tm, N), lambda i: (i, 0)),
        compiler_params=pltpu.CompilerParams(
            dimension_semantics=("parallel",),
            vmem_limit_bytes=32 * 1024 * 1024),
    )(x, w, b.reshape(1, N))


def matmul_res_ln_kernel(x_ref, w_ref, b_ref, r_ref, g_ref, beta_ref, o_ref):
    """LayerNorm((x @ w + b) + residual) * gamma + beta, fused epilogue."""
    x = _to_bf16(x_ref[...])
    acc = jnp.dot(x, w_ref[...], preferred_element_type=jnp.float32)
    y = acc + b_ref[...] + r_ref[...].astype(jnp.float32)
    o_ref[...] = _layernorm_f32(y, g_ref[...], beta_ref[...]).astype(o_ref.dtype)


def matmul_res_layernorm(x, w, b, res, gamma, beta, out_dtype=jnp.bfloat16):
    M, K = x.shape
    K2, N = w.shape
    assert K == K2 and res.shape == (M, N)
    tm = _pick_tile_m(M)
    return pl.pallas_call(
        matmul_res_ln_kernel,
        out_shape=jax.ShapeDtypeStruct((M, N), out_dtype),
        grid=(M // tm,),
        in_specs=[
            pl.BlockSpec((tm, K), lambda i: (i, 0)),
            pl.BlockSpec((K, N), lambda i: (0, 0)),
            pl.BlockSpec((1, N), lambda i: (0, 0)),
            pl.BlockSpec((tm, N), lambda i: (i, 0)),
            pl.BlockSpec((1, N), lambda i: (0, 0)),
            pl.BlockSpec((1, N), lambda i: (0, 0)),
        ],
        out_specs=pl.BlockSpec((tm, N), lambda i: (i, 0)),
        compiler_params=pltpu.CompilerParams(dimension_semantics=("parallel",)),
    )(x, w, b.reshape(1, N), res, gamma.reshape(1, N), beta.reshape(1, N))


def ffn_kernel(x_ref, w1_ref, b1_ref, w2_ref, b2_ref, g_ref, beta_ref, o_ref):
    """Whole FFN sub-block: LayerNorm(GELU(x@w1+b1)@w2 + b2 + x)."""
    x_in = x_ref[...]
    x_bf = _to_bf16(x_in)
    h = jnp.dot(x_bf, w1_ref[...], preferred_element_type=jnp.float32)
    h = _gelu(h + b1_ref[...])
    y = jnp.dot(h.astype(jnp.bfloat16), w2_ref[...],
                preferred_element_type=jnp.float32)
    y = y + b2_ref[...] + x_in.astype(jnp.float32)              # residual = input
    o_ref[...] = _layernorm_f32(y, g_ref[...], beta_ref[...]).astype(o_ref.dtype)


def ffn_block(x, w1, b1, w2, b2, gamma, beta, out_dtype=jnp.bfloat16):
    M, K = x.shape
    tm = _pick_tile_m(M)
    return pl.pallas_call(
        ffn_kernel,
        out_shape=jax.ShapeDtypeStruct((M, K), out_dtype),
        grid=(M // tm,),
        in_specs=[
            pl.BlockSpec((tm, K), lambda i: (i, 0)),
            pl.BlockSpec((K, INTERMEDIATE), lambda i: (0, 0)),
            pl.BlockSpec((1, INTERMEDIATE), lambda i: (0, 0)),
            pl.BlockSpec((INTERMEDIATE, K), lambda i: (0, 0)),
            pl.BlockSpec((1, K), lambda i: (0, 0)),
            pl.BlockSpec((1, K), lambda i: (0, 0)),
            pl.BlockSpec((1, K), lambda i: (0, 0)),
        ],
        out_specs=pl.BlockSpec((tm, K), lambda i: (i, 0)),
        compiler_params=pltpu.CompilerParams(
            dimension_semantics=("parallel",),
            # two double-buffered bf16 FFN weights (~18 MiB) exceed the 16 MiB
            # v5e default scoped-VMEM limit; raise it explicitly.
            vmem_limit_bytes=48 * 1024 * 1024),
    )(x, w1, b1.reshape(1, INTERMEDIATE), w2, b2.reshape(1, K),
      gamma.reshape(1, K), beta.reshape(1, K))


def ln_kernel(x_ref, g_ref, b_ref, o_ref):
    y = x_ref[...].astype(jnp.float32)
    o_ref[...] = _layernorm_f32(y, g_ref[...], b_ref[...]).astype(o_ref.dtype)


def layernorm(x, gamma, beta, out_dtype=jnp.bfloat16):
    M, H = x.shape
    tm = _pick_tile_m(M)
    return pl.pallas_call(
        ln_kernel,
        out_shape=jax.ShapeDtypeStruct((M, H), out_dtype),
        grid=(M // tm,),
        in_specs=[
            pl.BlockSpec((tm, H), lambda i: (i, 0)),
            pl.BlockSpec((1, H), lambda i: (0, 0)),
            pl.BlockSpec((1, H), lambda i: (0, 0)),
        ],
        out_specs=pl.BlockSpec((tm, H), lambda i: (i, 0)),
        compiler_params=pltpu.CompilerParams(dimension_semantics=("parallel",)),
    )(x, gamma.reshape(1, H), beta.reshape(1, H))


def attn_kernel(qkv_ref, bias_ref, o_ref, acc_ref, *, num_heads, head_dim):
    """One batch-group (>=1 batch elements, R rows) per grid step.

    qkv_ref:  (R, 3*HIDDEN) bf16 fused Q|K|V (1/sqrt(d) already folded into Wq)
    bias_ref: (1, R, R) f32 additive bias (padding mask + block-diagonal
              cross-batch mask)
    o_ref:    (R, HIDDEN) bf16 lane-dense context
    acc_ref:  (R, HIDDEN) f32 VMEM scratch; each head writes its 64-lane slice
              as soon as it is computed (no 12-way concat / live tiles).
    """
    qkv = qkv_ref[...]
    bias = bias_ref[0]                                   # (R, R) f32
    hid = num_heads * head_dim
    for h in range(num_heads):                           # static unrolled loop
        q = qkv[:, h * head_dim:(h + 1) * head_dim]
        k = qkv[:, hid + h * head_dim: hid + (h + 1) * head_dim]
        v = qkv[:, 2 * hid + h * head_dim: 2 * hid + (h + 1) * head_dim]
        s = jax.lax.dot_general(q, k, (((1,), (1,)), ((), ())),
                                preferred_element_type=jnp.float32)
        s = s + bias
        s = s - jnp.max(s, axis=-1, keepdims=True)
        p = jnp.exp(s)
        p = p * pl.reciprocal(jnp.sum(p, axis=-1, keepdims=True), approx=True)
        acc_ref[:, h * head_dim:(h + 1) * head_dim] = jnp.dot(
            p.astype(qkv.dtype), v, preferred_element_type=jnp.float32)
    o_ref[...] = acc_ref[...].astype(o_ref.dtype)


def attention(qkv, bias_blocks, rows_per_block):
    """qkv: (B*S, 3*HIDDEN) bf16; bias_blocks: (G, R, R) f32; R = rows_per_block."""
    M = qkv.shape[0]
    G = M // rows_per_block
    kern = functools.partial(attn_kernel, num_heads=NUM_HEADS, head_dim=HEAD_DIM)
    return pl.pallas_call(
        kern,
        out_shape=jax.ShapeDtypeStruct((M, HIDDEN), jnp.bfloat16),
        grid=(G,),
        in_specs=[
            pl.BlockSpec((rows_per_block, 3 * HIDDEN), lambda g: (g, 0)),
            pl.BlockSpec((1, rows_per_block, rows_per_block), lambda g: (g, 0, 0)),
        ],
        out_specs=pl.BlockSpec((rows_per_block, HIDDEN), lambda g: (g, 0)),
        scratch_shapes=[pltpu.VMEM((rows_per_block, HIDDEN), jnp.float32)],
        compiler_params=pltpu.CompilerParams(dimension_semantics=("parallel",)),
    )(qkv, bias_blocks)


# ------------------------------- parameters ---------------------------------
def init_params(key):
    scale = 1.0 / math.sqrt(HEAD_DIM)

    def nrm(k, shape):
        return 0.02 * jax.random.normal(k, shape, dtype=jnp.float32)

    keys = jax.random.split(key, 4 + NUM_LAYERS)
    params = {
        "word_emb": nrm(keys[0], (VOCAB, HIDDEN)),
        "pos_emb": nrm(keys[1], (MAX_POS, HIDDEN)),
        "type_emb": nrm(keys[2], (TYPE_VOCAB, HIDDEN)),
        "emb_ln_g": jnp.ones((HIDDEN,), jnp.float32),
        "emb_ln_b": jnp.zeros((HIDDEN,), jnp.float32),
        "layers": [],
    }
    for li in range(NUM_LAYERS):
        lk = jax.random.split(keys[3 + li], 4)
        wqkv = nrm(lk[0], (HIDDEN, 3 * HIDDEN))
        # Fold the 1/sqrt(head_dim) attention scale into the Q projection
        # (columns 0:HIDDEN) so the kernel never scales the (R, R) scores.
        wqkv = wqkv.at[:, :HIDDEN].multiply(scale)
        bqkv = jnp.zeros((3 * HIDDEN,), jnp.float32).at[:HIDDEN].multiply(scale)
        params["layers"].append({
            "wqkv": wqkv.astype(jnp.bfloat16),       # bf16 weights for the MXU
            "bqkv": bqkv,
            "wo": nrm(lk[1], (HIDDEN, HIDDEN)).astype(jnp.bfloat16),
            "bo": jnp.zeros((HIDDEN,), jnp.float32),
            "ln1_g": jnp.ones((HIDDEN,), jnp.float32),
            "ln1_b": jnp.zeros((HIDDEN,), jnp.float32),
            "w1": nrm(lk[2], (HIDDEN, INTERMEDIATE)).astype(jnp.bfloat16),
            "b1": jnp.zeros((INTERMEDIATE,), jnp.float32),
            "w2": nrm(lk[3], (INTERMEDIATE, HIDDEN)).astype(jnp.bfloat16),
            "b2": jnp.zeros((HIDDEN,), jnp.float32),
            "ln2_g": jnp.ones((HIDDEN,), jnp.float32),
            "ln2_b": jnp.zeros((HIDDEN,), jnp.float32),
        })
    fck = jax.random.split(keys[3 + NUM_LAYERS - 1], 2)[-1]
    params["fc_w"] = nrm(fck, (HIDDEN, NUM_CLASSES))
    params["fc_b"] = jnp.zeros((NUM_CLASSES,), jnp.float32)
    return params


# ------------------------------- forward pass --------------------------------
def model_forward(params, input_ids, attention_mask, token_type_ids):
    B, S = input_ids.shape

    # Embeddings (gather glue in plain JAX), then LayerNorm kernel -> bf16.
    x = (params["word_emb"][input_ids]
         + params["pos_emb"][jnp.arange(S)][None, :, :]
         + params["type_emb"][token_type_ids])
    x = x.reshape(B * S, HIDDEN).astype(jnp.float32)
    x = layernorm(x, params["emb_ln_g"], params["emb_ln_b"])     # bf16 (B*S, 768)

    # Per-block additive bias (padding mask + block-diagonal cross-batch mask).
    bb = _batch_per_block(B, S)
    rows = bb * S
    attn_bias = build_attn_bias(attention_mask, bb)              # (G, R, R) f32

    for lp in params["layers"]:
        # Fused Q|K|V projection: one call, weight streamed once, bf16 output.
        qkv = matmul_bias(x, lp["wqkv"], lp["bqkv"])             # (B*S, 2304) bf16
        # Batched-by-group attention, lane-dense (R, 768) context blocks.
        ctx = attention(qkv, attn_bias, rows)                    # (B*S, 768) bf16
        # Output projection + residual + LayerNorm fused in one kernel.
        x = matmul_res_layernorm(ctx, lp["wo"], lp["bo"], x,
                                 lp["ln1_g"], lp["ln1_b"])       # bf16
        # Whole FFN (w1 + GELU + w2 + residual + LN) fused in one kernel.
        x = ffn_block(x, lp["w1"], lp["b1"], lp["w2"], lp["b2"],
                      lp["ln2_g"], lp["ln2_b"])                  # bf16

    last_hidden = x.reshape(B, S, HIDDEN)
    cls = last_hidden[:, 0].astype(jnp.float32)       # == last_hidden_state[:, 0]
    # Final tiny classifier in plain JAX (2-wide output not worth a pallas_call).
    logits = cls @ params["fc_w"] + params["fc_b"]               # (B, 2) f32
    return logits


# ---------------------------------- main -------------------------------------
if __name__ == "__main__":
    key = jax.random.PRNGKey(0)
    pkey, ikey = jax.random.split(key)
    params = init_params(pkey)

    B, S = 2, 8
    input_ids = jax.random.randint(ikey, (B, S), 0, VOCAB, dtype=jnp.int32)
    attention_mask = jnp.array([[1, 1, 1, 1, 1, 1, 1, 1],
                                [1, 1, 1, 1, 1, 1, 0, 0]], dtype=jnp.int32)
    token_type_ids = jnp.zeros((B, S), dtype=jnp.int32)

    logits = model_forward(params, input_ids, attention_mask, token_type_ids)
    logits = jax.block_until_ready(logits)
    assert logits.shape == (B, NUM_CLASSES) and logits.dtype == jnp.float32
    assert bool(jnp.all(jnp.isfinite(logits)))
    print("KERNEL_OK")
</pallas_src>

<mosaic_0001>
module attributes {stable_mosaic.version = 11 : i64} {
  func.func @ln_kernel(%arg0: i32, %arg1: memref<16x768xf32, #tpu.memory_space<vmem>>, %arg2: memref<1x768xf32, #tpu.memory_space<vmem>>, %arg3: memref<1x768xf32, #tpu.memory_space<vmem>>, %arg4: memref<16x768xbf16, #tpu.memory_space<vmem>>) attributes {dimension_semantics = [#tpu.dimension_semantics<parallel>], iteration_bounds = array<i64: 1>, scalar_prefetch = 0 : i64, scratch_operands = 0 : i64, tpu.core_type = #tpu.core_type<tc>, window_params = [{transform_indices = @transform_0, window_bounds = array<i64: 16, 768>}, {pipeline_mode = #tpu.pipeline_mode<synchronous>, transform_indices = @transform_1, window_bounds = array<i64: 1, 768>}, {pipeline_mode = #tpu.pipeline_mode<synchronous>, transform_indices = @transform_2, window_bounds = array<i64: 1, 768>}, {transform_indices = @transform_3, window_bounds = array<i64: 16, 768>}]} {
    %c0 = arith.constant 0 : index
    %c0_0 = arith.constant 0 : index
    %0 = vector.load %arg1[%c0, %c0_0] : memref<16x768xf32, #tpu.memory_space<vmem>>, vector<16x768xf32>
    %c0_1 = arith.constant 0 : index
    %c0_2 = arith.constant 0 : index
    %1 = vector.load %arg2[%c0_1, %c0_2] : memref<1x768xf32, #tpu.memory_space<vmem>>, vector<1x768xf32>
    %c0_3 = arith.constant 0 : index
    %c0_4 = arith.constant 0 : index
    %2 = vector.load %arg3[%c0_3, %c0_4] : memref<1x768xf32, #tpu.memory_space<vmem>>, vector<1x768xf32>
    %cst = arith.constant dense<0.000000e+00> : vector<16xf32>
    %3 = vector.multi_reduction <add>, %0, %cst [1] : vector<16x768xf32> to vector<16xf32>
    %4 = vector.shape_cast %3 : vector<16xf32> to vector<16x1xf32>
    %cst_5 = arith.constant 7.680000e+02 : f32
    %5 = vector.broadcast %cst_5 : f32 to vector<16x1xf32>
    %6 = arith.divf %4, %5 : vector<16x1xf32>
    %7 = vector.broadcast %6 : vector<16x1xf32> to vector<16x768xf32>
    %8 = arith.subf %0, %7 : vector<16x768xf32>
    %9 = vector.broadcast %6 : vector<16x1xf32> to vector<16x768xf32>
    %10 = arith.subf %0, %9 : vector<16x768xf32>
    %11 = arith.mulf %8, %10 : vector<16x768xf32>
    %cst_6 = arith.constant dense<0.000000e+00> : vector<16xf32>
    %12 = vector.multi_reduction <add>, %11, %cst_6 [1] : vector<16x768xf32> to vector<16xf32>
    %13 = vector.shape_cast %12 : vector<16xf32> to vector<16x1xf32>
    %cst_7 = arith.constant 7.680000e+02 : f32
    %14 = vector.broadcast %cst_7 : f32 to vector<16x1xf32>
    %15 = arith.divf %13, %14 : vector<16x1xf32>
    %16 = vector.broadcast %6 : vector<16x1xf32> to vector<16x768xf32>
    %17 = arith.subf %0, %16 : vector<16x768xf32>
    %cst_8 = arith.constant 9.99999996E-13 : f32
    %18 = vector.broadcast %cst_8 : f32 to vector<16x1xf32>
    %19 = arith.addf %15, %18 : vector<16x1xf32>
    %20 = math.rsqrt %19 : vector<16x1xf32>
    %21 = vector.broadcast %20 : vector<16x1xf32> to vector<16x768xf32>
    %22 = arith.mulf %17, %21 : vector<16x768xf32>
    %23 = vector.broadcast %1 : vector<1x768xf32> to vector<16x768xf32>
    %24 = arith.mulf %22, %23 : vector<16x768xf32>
    %25 = vector.broadcast %2 : vector<1x768xf32> to vector<16x768xf32>
    %26 = arith.addf %24, %25 : vector<16x768xf32>
    %27 = arith.truncf %26 : vector<16x768xf32> to vector<16x768xbf16>
    %c0_9 = arith.constant 0 : index
    %c0_10 = arith.constant 0 : index
    %28 = vector.load %arg4[%c0_9, %c0_10] : memref<16x768xbf16, #tpu.memory_space<vmem>>, vector<16x768xbf16>
    tpu.vector_store %arg4[%c0_9, %c0_10], %27 {strides = array<i32>} : memref<16x768xbf16, #tpu.memory_space<vmem>>, vector<16x768xbf16>,
    return
  }
  func.func @transform_0(%arg0: i32) -> (i32, i32) {
    %c0_i32 = arith.constant 0 : i32
    %c0_i32_0 = arith.constant 0 : i32
    return %arg0, %c0_i32 : i32, i32
  }
  func.func @transform_1(%arg0: i32) -> (i32, i32) {
    %c0_i32 = arith.constant 0 : i32
    %c0_i32_0 = arith.constant 0 : i32
    %c0_i32_1 = arith.constant 0 : i32
    return %c0_i32, %c0_i32_0 : i32, i32
  }
  func.func @transform_2(%arg0: i32) -> (i32, i32) {
    %c0_i32 = arith.constant 0 : i32
    %c0_i32_0 = arith.constant 0 : i32
    %c0_i32_1 = arith.constant 0 : i32
    return %c0_i32, %c0_i32_0 : i32, i32
  }
  func.func @transform_3(%arg0: i32) -> (i32, i32) {
    %c0_i32 = arith.constant 0 : i32
    %c0_i32_0 = arith.constant 0 : i32
    return %arg0, %c0_i32 : i32, i32
  }
}

</mosaic_0001>

<llo_original>
// kernel: tpu_custom_call.1
$region0: #{tpu_custom_call.1}
  #allocation0 [shape = 'u32[]', space=smem, size = 0x4, offset = 0x4, fixed_abs, tag = 'smem constant byte address 0x4 - core index']
  #allocation1 [shape = 'u32[144,128]{1,0:T(1,128)}', space=vmem, size = 0x12000, scoped, tag = 'internal scratch']
  %s0 = inlined_call_operand.hbm [shape: f32[16,768], index: 0, kind: input, shape index: {}]
  %s1 = inlined_call_operand.hbm [shape: f32[1,768], index: 1, kind: input, shape index: {}]
  %s2 = inlined_call_operand.vmem [shape: f32[1,768], index: 2, kind: input, shape index: {}]
  %s3 = inlined_call_operand.hbm [shape: bf16[16,768], index: 3, kind: output, shape index: {}]
  %s4 = sld [smem:[#allocation0]]
  $region30: #{tpu_custom_call.1} parent=0
    _
  %s6 = ssub.s32 1, %s4
  %s7 = scalar_select 0, %s6, %s4
  $region1: #{tpu_custom_call.1} parent=0
    #allocation2 [shape = 'u8[49152]{0}', space=vmem, size = 0xc000, scoped, tag = 'input window, operand 0, single buffered']
    #allocation3 [shape = 's32[1]{0}', space=sflag, size = 0x4, scoped, tag = 'scoped memory for tpu_custom_call.1']
    #allocation4 [shape = 's32[1]{0}', space=sflag, size = 0x4, scoped, tag = 'scoped memory for tpu_custom_call.1']
    #allocation5 [shape = 'u8[3072]{0}', space=vmem, size = 0xc00, scoped, tag = 'input window, operand 1, single buffered']
    #allocation6 [shape = 's32[1]{0}', space=sflag, size = 0x4, scoped, tag = 'scoped memory for tpu_custom_call.1']
    #allocation7 [shape = 'u8[24576]{0}', space=vmem, size = 0x6000, scoped, tag = 'output window, operand 0, single buffered']
    %8 = vsyncpa [#allocation3], 0
    %9 = vsyncpa [#allocation6], 0
    %10 = vsyncpa [#allocation4], 0
    // Predicated region
    $region2: #{tpu_custom_call.1} parent=1 // pred_check
      _
    $region3: #{tpu_custom_call.1} parent=1 // pred_check_branch
      %12 = sbr.rel (0) target = $region5
    $region4: #{tpu_custom_call.1} parent=1 // pred_region
      %s14 = ssub.s32 1536, 1536
      %15 = vsyncadd [#allocation3], %s14
      %s16 = sshll.u32 [#allocation2], 4
      %s17 = int_to_ptr.vmem [resolvable:$true] %s16
      %22 = dma.hbm_to_vmem [thread:$0]  %s0, 1536, %s17, [#allocation3], 768, 768, 48
    $region5: #{tpu_custom_call.1} parent=1 // pred_fallthru
      _
    // Predicated region
    $region6: #{tpu_custom_call.1} parent=1 // pred_check
      _
    $region7: #{tpu_custom_call.1} parent=1 // pred_check_branch
      %24 = sbr.rel (0) target = $region9
    $region8: #{tpu_custom_call.1} parent=1 // pred_region
      %s26 = ssub.s32 96, 96
      %27 = vsyncadd [#allocation6], %s26
      %s29 = sshll.u32 [#allocation5], 4
      %s30 = int_to_ptr.vmem [resolvable:$true] %s29
      %32 = dma.hbm_to_vmem [thread:$0]  %s1, 96, %s30, [#allocation6]
    $region9: #{tpu_custom_call.1} parent=1 // pred_fallthru
      _
    // Predicated region
    $region10: #{tpu_custom_call.1} parent=1 // pred_check
      _
    $region11: #{tpu_custom_call.1} parent=1 // pred_check_branch
      %34 = sbr.rel (0) target = $region13
    $region12: #{tpu_custom_call.1} parent=1 // pred_region
      _
    $region13: #{tpu_custom_call.1} parent=1 // pred_fallthru
      _
    // Predicated region
    $region14: #{tpu_custom_call.1} parent=1 // pred_check
      _
    $region15: #{tpu_custom_call.1} parent=1 // pred_check_branch
      %36 = sbr.rel (0) target = $region17
    $region16: #{tpu_custom_call.1} parent=1 // pred_region
      %37 = dma.done [#allocation3], 1536
    $region17: #{tpu_custom_call.1} parent=1 // pred_fallthru
      _
    // Predicated region
    $region18: #{tpu_custom_call.1} parent=1 // pred_check
      _
    $region19: #{tpu_custom_call.1} parent=1 // pred_check_branch
      %39 = sbr.rel (0) target = $region21
    $region20: #{tpu_custom_call.1} parent=1 // pred_region
      %40 = dma.done [#allocation6], 96
    $region21: #{tpu_custom_call.1} parent=1 // pred_fallthru
      _
    %v41 = vld [vmem:[#allocation2] sm:$0xff]
    %v42 = vld [vmem:[#allocation2 + $0x8] sm:$0xff]
    %v43 = vld [vmem:[#allocation2 + $0x10] sm:$0xff]
    %v44 = vld [vmem:[#allocation2 + $0x18] sm:$0xff]
    %v45 = vld [vmem:[#allocation2 + $0x20] sm:$0xff]
    %v46 = vld [vmem:[#allocation2 + $0x28] sm:$0xff]
    %v47 = vld [vmem:[#allocation2 + $0x30] sm:$0xff]
    %v48 = vld [vmem:[#allocation2 + $0x38] sm:$0xff]
    %v49 = vld [vmem:[#allocation2 + $0x40] sm:$0xff]
    %v50 = vld [vmem:[#allocation2 + $0x48] sm:$0xff]
    %v51 = vld [vmem:[#allocation2 + $0x50] sm:$0xff]
    %v52 = vld [vmem:[#allocation2 + $0x58] sm:$0xff]
    %v53 = vld [vmem:[#allocation5] sm:$0x3f]
    %v54 = vld [vmem:[%s2] sm:$0x3f]
    %v55 = vadd.f32 %v41, %v42
    %v56 = vadd.f32 %v55, %v43
    %v57 = vadd.f32 %v56, %v44
    %v58 = vadd.f32 %v57, %v45
    %v59 = vadd.f32 %v58, %v46
    %60 = vadd.xlane.f32.xlu0 %v59
    %v61 = vpop.xlane.xlu0 %60
    %v62 = vadd.f32 %v47, %v48
    %v63 = vadd.f32 %v62, %v49
    %v64 = vadd.f32 %v63, %v50
    %v65 = vadd.f32 %v64, %v51
    %v66 = vadd.f32 %v65, %v52
    %67 = vadd.xlane.f32.xlu0 %v66
    %v68 = vpop.xlane.xlu0 %67
    %v69 = vrcp.pop 768.0
    %v70 = vmul.f32 %v61, %v69
    %v71 = vmul.f32 %v68, %v69
    %v72 = vsub.f32 %v41, %v70
    %v73 = vsub.f32 %v42, %v70
    %v74 = vsub.f32 %v43, %v70
    %v75 = vsub.f32 %v44, %v70
    %v76 = vsub.f32 %v45, %v70
    %v77 = vsub.f32 %v46, %v70
    %v78 = vsub.f32 %v47, %v71
    %v79 = vsub.f32 %v48, %v71
    %v80 = vsub.f32 %v49, %v71
    %v81 = vsub.f32 %v50, %v71
    %v82 = vsub.f32 %v51, %v71
    %v83 = vsub.f32 %v52, %v71
    %v84 = vmul.f32 %v72, %v72
    %v85 = vmul.f32 %v73, %v73
    %v86 = vmul.f32 %v74, %v74
    %v87 = vmul.f32 %v75, %v75
    %v88 = vmul.f32 %v76, %v76
    %v89 = vmul.f32 %v77, %v77
    %v90 = vmul.f32 %v78, %v78
    %v91 = vmul.f32 %v79, %v79
    %v92 = vmul.f32 %v80, %v80
    %v93 = vmul.f32 %v81, %v81
    %v94 = vmul.f32 %v82, %v82
    %v95 = vmul.f32 %v83, %v83
    %v96 = vadd.f32 %v84, %v85
    %v97 = vadd.f32 %v96, %v86
    %v98 = vadd.f32 %v97, %v87
    %v99 = vadd.f32 %v98, %v88
    %v100 = vadd.f32 %v99, %v89
    %101 = vadd.xlane.f32.xlu0 %v100
    %v102 = vpop.xlane.xlu0 %101
    %v103 = vadd.f32 %v90, %v91
    %v104 = vadd.f32 %v103, %v92
    %v105 = vadd.f32 %v104, %v93
    %v106 = vadd.f32 %v105, %v94
    %v107 = vadd.f32 %v106, %v95
    %108 = vadd.xlane.f32.xlu0 %v107
    %v109 = vpop.xlane.xlu0 %108
    %v110 = vmul.f32 %v102, %v69
    %v111 = vmul.f32 %v109, %v69
    %v112 = vadd.f32 %v110, 1e-12
    %v113 = vadd.f32 %v111, 1e-12
    %v114 = vrsqrt.pop %v112
    %v115 = vrsqrt.pop %v113
    %v116 = vmul.f32 %v72, %v114
    %v117 = vmul.f32 %v73, %v114
    %v118 = vmul.f32 %v74, %v114
    %v119 = vmul.f32 %v75, %v114
    %v120 = vmul.f32 %v76, %v114
    %v121 = vmul.f32 %v77, %v114
    %v122 = vmul.f32 %v78, %v115
    %v123 = vmul.f32 %v79, %v115
    %v124 = vmul.f32 %v80, %v115
    %v125 = vmul.f32 %v81, %v115
    %v126 = vmul.f32 %v82, %v115
    %v127 = vmul.f32 %v83, %v115
    %v129 = vlaneseq
    %v130 = vshrl.u32 %v129, 7
    %v131 = vsub.s32 0, %v130
    %v132 = vrot.slane %v53, %v131
    %v133 = vlaneseq
    %v134 = vshrl.u32 %v133, 7
    %v135 = vsub.s32 1, %v134
    %v136 = vrot.slane %v53, %v135
    %v137 = vlaneseq
    %v138 = vshrl.u32 %v137, 7
    %v139 = vsub.s32 2, %v138
    %v140 = vrot.slane %v53, %v139
    %v141 = vlaneseq
    %v142 = vshrl.u32 %v141, 7
    %v143 = vsub.s32 3, %v142
    %v144 = vrot.slane %v53, %v143
    %v145 = vlaneseq
    %v146 = vshrl.u32 %v145, 7
    %v147 = vsub.s32 4, %v146
    %v148 = vrot.slane %v53, %v147
    %v149 = vlaneseq
    %v150 = vshrl.u32 %v149, 7
    %v151 = vsub.s32 5, %v150
    %v152 = vrot.slane %v53, %v151
    %v159 = vmul.f32 %v116, %v132
    %v160 = vmul.f32 %v117, %v136
    %v161 = vmul.f32 %v118, %v140
    %v162 = vmul.f32 %v119, %v144
    %v163 = vmul.f32 %v120, %v148
    %v164 = vmul.f32 %v121, %v152
    %v165 = vmul.f32 %v122, %v132
    %v166 = vmul.f32 %v123, %v136
    %v167 = vmul.f32 %v124, %v140
    %v168 = vmul.f32 %v125, %v144
    %v169 = vmul.f32 %v126, %v148
    %v170 = vmul.f32 %v127, %v152
    %v172 = vlaneseq
    %v173 = vshrl.u32 %v172, 7
    %v174 = vsub.s32 0, %v173
    %v175 = vrot.slane %v54, %v174
    %v176 = vlaneseq
    %v177 = vshrl.u32 %v176, 7
    %v178 = vsub.s32 1, %v177
    %v179 = vrot.slane %v54, %v178
    %v180 = vlaneseq
    %v181 = vshrl.u32 %v180, 7
    %v182 = vsub.s32 2, %v181
    %v183 = vrot.slane %v54, %v182
    %v184 = vlaneseq
    %v185 = vshrl.u32 %v184, 7
    %v186 = vsub.s32 3, %v185
    %v187 = vrot.slane %v54, %v186
    %v188 = vlaneseq
    %v189 = vshrl.u32 %v188, 7
    %v190 = vsub.s32 4, %v189
    %v191 = vrot.slane %v54, %v190
    %v192 = vlaneseq
    %v193 = vshrl.u32 %v192, 7
    %v194 = vsub.s32 5, %v193
    %v195 = vrot.slane %v54, %v194
    %v202 = vadd.f32 %v159, %v175
    %v203 = vadd.f32 %v160, %v179
    %v204 = vadd.f32 %v161, %v183
    %v205 = vadd.f32 %v162, %v187
    %v206 = vadd.f32 %v163, %v191
    %v207 = vadd.f32 %v164, %v195
    %v208 = vadd.f32 %v165, %v175
    %v209 = vadd.f32 %v166, %v179
    %v210 = vadd.f32 %v167, %v183
    %v211 = vadd.f32 %v168, %v187
    %v212 = vadd.f32 %v169, %v191
    %v213 = vadd.f32 %v170, %v195
    %v214 = vpack.c.bf16 %v208, %v202
    %v215 = vpack.c.bf16 %v209, %v203
    %v216 = vpack.c.bf16 %v210, %v204
    %v217 = vpack.c.bf16 %v211, %v205
    %v218 = vpack.c.bf16 %v212, %v206
    %v219 = vpack.c.bf16 %v213, %v207
    %v226 = vunpack.c.l.b16 %v214
    %v227 = vunpack.c.l.b16 %v215
    %v228 = vunpack.c.l.b16 %v216
    %v229 = vunpack.c.l.b16 %v217
    %v230 = vunpack.c.l.b16 %v218
    %v231 = vunpack.c.l.b16 %v219
    %v232 = vunpack.c.h.b16 %v214
    %v233 = vunpack.c.h.b16 %v215
    %v234 = vunpack.c.h.b16 %v216
    %v235 = vunpack.c.h.b16 %v217
    %v236 = vunpack.c.h.b16 %v218
    %v237 = vunpack.c.h.b16 %v219
    %v238 = vpack.c.b16 %v227, %v226
    %v239 = vpack.c.b16 %v229, %v228
    %v240 = vpack.c.b16 %v231, %v230
    %v241 = vpack.c.b16 %v233, %v232
    %v242 = vpack.c.b16 %v235, %v234
    %v243 = vpack.c.b16 %v237, %v236
    %250 = vst [vmem:[#allocation7] sm:$0xff] %v238
    %251 = vst [vmem:[#allocation7 + $0x8] sm:$0xff] %v239
    %252 = vst [vmem:[#allocation7 + $0x10] sm:$0xff] %v240
    %253 = vst [vmem:[#allocation7 + $0x18] sm:$0xff] %v241
    %254 = vst [vmem:[#allocation7 + $0x20] sm:$0xff] %v242
    %255 = vst [vmem:[#allocation7 + $0x28] sm:$0xff] %v243
    // Predicated region
    $region22: #{tpu_custom_call.1} parent=1 // pred_check
      _
    $region23: #{tpu_custom_call.1} parent=1 // pred_check_branch
      %257 = sbr.rel (0) target = $region25
    $region24: #{tpu_custom_call.1} parent=1 // pred_region
      %s259 = ssub.s32 768, 768
      %260 = vsyncadd [#allocation4], %s259
      %s261 = sshll.u32 [#allocation7], 4
      %s262 = int_to_ptr.vmem [resolvable:$true] %s261
      %267 = dma.vmem_to_hbm [thread:$0]  %s262, 768, %s3, [#allocation4], 384, 384, 24
    $region25: #{tpu_custom_call.1} parent=1 // pred_fallthru
      _
    // Predicated region
    $region26: #{tpu_custom_call.1} parent=1 // pred_check
      _
    $region27: #{tpu_custom_call.1} parent=1 // pred_check_branch
      %269 = sbr.rel (0) target = $region29
    $region28: #{tpu_custom_call.1} parent=1 // pred_region
      %270 = dma.done [#allocation4], 768
    $region29: #{tpu_custom_call.1} parent=1 // pred_fallthru
      _
    %271 = vsyncpa [#allocation3], 1
    %272 = vsyncpa [#allocation6], 1
    %273 = vsyncpa [#allocation4], 1

</llo_original>
